<compile_context>
chip_gen: v7x
topology: tpu7x:2x2x1
jax: 0.10.0
libtpu: 0.0.40
codegen_flags: <defaults>
</compile_context>

<pallas_src>
import functools

import jax
import jax.numpy as jnp
from jax.experimental import pallas as pl
from jax.experimental.pallas import tpu as pltpu


def _round_up(x, m):
    return (x + m - 1) // m * m


def _pick_tk(D, tk):
    """Contraction-tile size: must divide D exactly (no partial K blocks)."""
    if D <= tk:
        return D
    if D % tk == 0:
        return tk
    start = (tk // 128) * 128
    for cand in range(start, 0, -128):
        if D % cand == 0:
            return cand
    return D  # fallback: whole D in one block


def _lm_head_kernel(h_ref, w_ref, o_ref, acc_ref):
    # h_ref: (tm, tk) hidden tile
    # w_ref: (tn, tk) embedding-weight tile in native (V, D) layout
    # o_ref: (tm, tn) logits tile
    # acc_ref: (tm, tn) f32 accumulator (resident across the D axis)
    @pl.when(pl.program_id(2) == 0)
    def _():
        acc_ref[...] = jnp.zeros_like(acc_ref)

    h = h_ref[...]
    w = w_ref[...]
    if h.dtype != w.dtype:
        # Compute in the weight's (storage) dtype; f32 accumulation below.
        h = h.astype(w.dtype)

    # Contract the shared D axis directly (== h @ W^T), f32 MXU accumulation.
    acc_ref[...] += jax.lax.dot_general(
        h, w,
        dimension_numbers=(((1,), (1,)), ((), ())),
        preferred_element_type=jnp.float32,
    )

    @pl.when(pl.program_id(2) == pl.num_programs(2) - 1)
    def _():
        o_ref[...] = acc_ref[...].astype(o_ref.dtype)


def prepare_decoder_weight(embed_weight, n_decoding_vocab, dtype=jnp.bfloat16):
    """One-time (module-init) slice + cast of the tied embedding.

    Do this ONCE and keep the result as a persistent parameter; it must not be
    done per forward call (it costs a full HBM pass over the embedding).
    """
    w = embed_weight[: int(n_decoding_vocab)]
    if dtype is not None:
        w = w.astype(dtype)
    return w


def lm_head_forward(
    h,
    embed_weight,
    n_decoding_vocab,
    last_only=False,
    *,
    tm=512,            # M tile (rows of flattened hidden states)
    tn=512,            # vocab tile (always forced to a multiple of 128)
    tk=2048,           # D (contraction) tile target
    out_dtype=None,    # logits dtype; None -> h.dtype (use bf16 if feeding softmax)
):
    """Equivalent of LMHead.forward.

    h            : (B, T, D)
    embed_weight : (V, D) tied embedding / decoder weight (any dtype; store it
                   in bf16 via prepare_decoder_weight for v6e/v7x decode).
    returns      : (B, T', n_decoding_vocab), T' = 1 if last_only else T
    """
    if last_only:
        h = h[:, -1:, :]

    B, T, D = h.shape
    M = B * T
    V_dec = int(n_decoding_vocab)
    V_w = embed_weight.shape[0]
    assert embed_weight.shape[1] == D, "embedding dim mismatch"
    out_dtype = out_dtype or h.dtype

    h2d = h.reshape(M, D)

    # --- tile-size selection -------------------------------------------------
    # M: clamp to full M when small (legal as the full second-to-last dim).
    tm_eff = M if M <= tm else tm
    grid_m = pl.cdiv(M, tm_eff)
    M_out = grid_m * tm_eff

    # Vocab: lane-dense (multiple of 128); grid only covers the decoding vocab,
    # so position-embedding rows are never streamed.
    tn_eff = min(tn, _round_up(V_dec, 128))
    grid_n = pl.cdiv(V_dec, tn_eff)
    N_out = grid_n * tn_eff

    # D: must divide exactly (partial contraction blocks would be incorrect).
    tk_eff = _pick_tk(D, tk)
    grid_k = D // tk_eff

    # --- cost / VMEM bookkeeping ---------------------------------------------
    h_isz = jnp.dtype(h2d.dtype).itemsize
    w_isz = jnp.dtype(embed_weight.dtype).itemsize
    out_isz = jnp.dtype(out_dtype).itemsize

    cost = pl.CostEstimate(
        flops=int(2 * M_out * D * N_out),
        transcendentals=0,
        bytes_accessed=int(
            grid_n * M * D * h_isz                       # h re-streamed per vocab tile
            + grid_m * min(N_out, V_w) * D * w_isz       # weight re-streamed per M tile
            + M_out * N_out * out_isz                    # logits writeback
        ),
    )

    # Double-buffered h / w / out tiles + f32 accumulator + headroom, capped at
    # ~75% of physical VMEM (v7x has only 64 MiB; v5e/v6e 128 MiB).
    tile_bytes = (
        2 * (tm_eff * tk_eff * h_isz + tn_eff * tk_eff * w_isz
             + tm_eff * tn_eff * out_isz)
        + tm_eff * tn_eff * 4
    )
    try:
        vmem_cap = int(pltpu.get_tpu_info().vmem_capacity_bytes * 3 // 4)
    except Exception:
        vmem_cap = 48 << 20  # safe for 64 MiB v7x
    vmem_bytes = int(min(max(tile_bytes + (4 << 20), 32 << 20), vmem_cap))

    # --- kernel call -----------------------------------------------------------
    logits2d = pl.pallas_call(
        _lm_head_kernel,
        out_shape=jax.ShapeDtypeStruct((M_out, N_out), out_dtype),
        grid_spec=pltpu.PrefetchScalarGridSpec(
            num_scalar_prefetch=0,
            grid=(grid_m, grid_n, grid_k),
            in_specs=[
                # hidden tile: varies with (i, k); resident across vocab when grid_k == 1
                pl.BlockSpec((tm_eff, tk_eff), lambda i, j, k: (i, k)),
                # weight streams in native (V, D) layout, tiled over vocab and D
                pl.BlockSpec((tn_eff, tk_eff), lambda i, j, k: (j, k)),
            ],
            out_specs=pl.BlockSpec((tm_eff, tn_eff), lambda i, j, k: (i, j)),
            scratch_shapes=[pltpu.VMEM((tm_eff, tn_eff), jnp.float32)],
        ),
        compiler_params=pltpu.CompilerParams(
            dimension_semantics=("parallel", "parallel", "arbitrary"),
            vmem_limit_bytes=vmem_bytes,
        ),
        cost_estimate=cost,
    )(h2d, embed_weight)

    if M_out != M or N_out != V_dec:
        logits2d = logits2d[:M, :V_dec]
    return logits2d.reshape(B, T, V_dec)


if __name__ == "__main__":
    # Small, forward-implied shapes.
    B, T, D = 2, 8, 32          # batch, seq, n_embd
    n_vocab = 50
    n_ctx = 12
    V = n_vocab + 2 + n_ctx     # total embedding rows (vocab + 2 special + positions)
    n_decoding_vocab = n_vocab + 2

    key = jax.random.PRNGKey(0)
    k_h, k_w = jax.random.split(key)
    h = jax.random.normal(k_h, (B, T, D), dtype=jnp.float32)
    embed_weight = jax.random.normal(k_w, (V, D), dtype=jnp.float32) * 0.02

    ref = jnp.einsum("btd,vd->btv", h, embed_weight)[:, :, :n_decoding_vocab]

    # f32 path (exact parity with the PyTorch module); full embedding passed
    # directly — no wrapper-side slice/cast/pad copies.
    fwd = jax.jit(functools.partial(lm_head_forward, n_decoding_vocab=n_decoding_vocab))
    out = jax.block_until_ready(fwd(h, embed_weight))
    assert out.shape == (B, T, n_decoding_vocab), out.shape
    assert jnp.allclose(out, ref, atol=1e-4, rtol=1e-4)

    # last_only decode path (tiny M -> tm clamped to full dim).
    out_last = jax.block_until_ready(
        lm_head_forward(h, embed_weight, n_decoding_vocab, last_only=True)
    )
    assert out_last.shape == (B, 1, n_decoding_vocab), out_last.shape
    assert jnp.allclose(out_last, ref[:, -1:, :], atol=1e-4, rtol=1e-4)

    # bf16 weight-storage path (recommended on v6e/v7x): one-time cast at
    # "module init", streamed at half the HBM bytes, f32 MXU accumulation.
    w_bf16 = prepare_decoder_weight(embed_weight, n_decoding_vocab, dtype=jnp.bfloat16)
    out_bf16 = jax.block_until_ready(
        lm_head_forward(h, w_bf16, n_decoding_vocab)
    )
    assert out_bf16.shape == (B, T, n_decoding_vocab), out_bf16.shape
    assert jnp.allclose(out_bf16.astype(jnp.float32), ref, atol=2e-2, rtol=5e-2)

    print("KERNEL_OK")
</pallas_src>

<mosaic_0001>
module attributes {stable_mosaic.version = 11 : i64} {
  func.func @_lm_head_kernel(%arg0: i32, %arg1: i32, %arg2: i32, %arg3: memref<16x32xf32, #tpu.memory_space<vmem>>, %arg4: memref<128x32xf32, #tpu.memory_space<vmem>>, %arg5: memref<16x128xf32, #tpu.memory_space<vmem>>, %arg6: memref<16x128xf32, #tpu.memory_space<vmem>>) attributes {dimension_semantics = [#tpu.dimension_semantics<parallel>, #tpu.dimension_semantics<parallel>, #tpu.dimension_semantics<arbitrary>], iteration_bounds = array<i64: 1, 1, 1>, scalar_prefetch = 0 : i64, scratch_operands = 1 : i64, tpu.core_type = #tpu.core_type<tc>, window_params = [{transform_indices = @transform_0, window_bounds = array<i64: 16, 32>}, {transform_indices = @transform_1, window_bounds = array<i64: 128, 32>}, {transform_indices = @transform_2, window_bounds = array<i64: 16, 128>}]} {
    %c0_i32 = arith.constant 0 : i32
    %0 = arith.cmpi eq, %arg2, %c0_i32 : i32
    %1 = arith.extui %0 : i1 to i32
    %c0_i32_0 = arith.constant 0 : i32
    %2 = arith.cmpi ne, %1, %c0_i32_0 : i32
    scf.if %2 {
      %cst_10 = arith.constant 0.000000e+00 : f32
      %12 = vector.broadcast %cst_10 : f32 to vector<16x128xf32>
      %c0_11 = arith.constant 0 : index
      %c0_12 = arith.constant 0 : index
      %13 = vector.load %arg6[%c0_11, %c0_12] : memref<16x128xf32, #tpu.memory_space<vmem>>, vector<16x128xf32>
      tpu.vector_store %arg6[%c0_11, %c0_12], %12 {strides = array<i32>} : memref<16x128xf32, #tpu.memory_space<vmem>>, vector<16x128xf32>,
    } else {
    }
    %c0 = arith.constant 0 : index
    %c0_1 = arith.constant 0 : index
    %3 = vector.load %arg3[%c0, %c0_1] : memref<16x32xf32, #tpu.memory_space<vmem>>, vector<16x32xf32>
    %c0_2 = arith.constant 0 : index
    %c0_3 = arith.constant 0 : index
    %4 = vector.load %arg4[%c0_2, %c0_3] : memref<128x32xf32, #tpu.memory_space<vmem>>, vector<128x32xf32>
    %c0_4 = arith.constant 0 : index
    %c0_5 = arith.constant 0 : index
    %5 = vector.load %arg6[%c0_4, %c0_5] : memref<16x128xf32, #tpu.memory_space<vmem>>, vector<16x128xf32>
    %cst = arith.constant dense<0.000000e+00> : vector<16x128xf32>
    %6 = tpu.matmul %3, %4, %cst {dimension_numbers = #tpu.dot_dimension_numbers<[1], [1], [0], [0], [0, 0, 1, 0], [], []>} : vector<16x32xf32>, vector<128x32xf32>, vector<16x128xf32> -> vector<16x128xf32>
    %7 = arith.addf %5, %6 : vector<16x128xf32>
    %c0_6 = arith.constant 0 : index
    %c0_7 = arith.constant 0 : index
    %8 = vector.load %arg6[%c0_6, %c0_7] : memref<16x128xf32, #tpu.memory_space<vmem>>, vector<16x128xf32>
    tpu.vector_store %arg6[%c0_6, %c0_7], %7 {strides = array<i32>} : memref<16x128xf32, #tpu.memory_space<vmem>>, vector<16x128xf32>,
    %c0_i32_8 = arith.constant 0 : i32
    %9 = arith.cmpi eq, %arg2, %c0_i32_8 : i32
    %10 = arith.extui %9 : i1 to i32
    %c0_i32_9 = arith.constant 0 : i32
    %11 = arith.cmpi ne, %10, %c0_i32_9 : i32
    scf.if %11 {
      %c0_10 = arith.constant 0 : index
      %c0_11 = arith.constant 0 : index
      %12 = vector.load %arg6[%c0_10, %c0_11] : memref<16x128xf32, #tpu.memory_space<vmem>>, vector<16x128xf32>
      %c0_12 = arith.constant 0 : index
      %c0_13 = arith.constant 0 : index
      %13 = vector.load %arg5[%c0_12, %c0_13] : memref<16x128xf32, #tpu.memory_space<vmem>>, vector<16x128xf32>
      tpu.vector_store %arg5[%c0_12, %c0_13], %12 {strides = array<i32>} : memref<16x128xf32, #tpu.memory_space<vmem>>, vector<16x128xf32>,
    } else {
    }
    return
  }
  func.func @transform_0(%arg0: i32, %arg1: i32, %arg2: i32) -> (i32, i32) {
    %c0_i32 = arith.constant 0 : i32
    return %arg0, %arg2 : i32, i32
  }
  func.func @transform_1(%arg0: i32, %arg1: i32, %arg2: i32) -> (i32, i32) {
    %c0_i32 = arith.constant 0 : i32
    return %arg1, %arg2 : i32, i32
  }
  func.func @transform_2(%arg0: i32, %arg1: i32, %arg2: i32) -> (i32, i32) {
    %c0_i32 = arith.constant 0 : i32
    return %arg0, %arg1 : i32, i32
  }
}

</mosaic_0001>

<llo_original>
// kernel: lm_head_forward.1
$region0: #{lm_head_forward.1}
  #allocation0 [shape = 'u32[]', space=smem, size = 0x4, offset = 0x4, fixed_abs, tag = 'smem constant byte address 0x4 - core index']
  #allocation1 [shape = 'u32[144,128]{1,0:T(1,128)}', space=vmem, size = 0x12000, scoped, tag = 'internal scratch']
  #allocation2 [shape = 'f32[16,128]{1,0:T(8,128)}', space=vmem, size = 0x2000, scoped, tag = 'scratch operand']
  %s0 = inlined_call_operand.vmem [shape: f32[16,32], index: 0, kind: input, shape index: {}]
  %s1 = inlined_call_operand.vmem [shape: f32[64,32], index: 1, kind: input, shape index: {}]
  %s2 = inlined_call_operand.vmem [shape: f32[16,128], index: 2, kind: output, shape index: {}]
  %s3 = sld [smem:[#allocation0]]
  $region26: #{lm_head_forward.1} parent=0
    _
  %s5 = ssub.s32 1, %s3
  %s6 = scalar_select 0, %s5, %s3
  // Predicated region
  $region2: #{lm_head_forward.1} parent=0 // pred_check
    _
  $region3: #{lm_head_forward.1} parent=0 // pred_check_branch
    %8 = sbr.rel (0) target = $region5
  $region4: #{lm_head_forward.1} parent=0 // pred_region
    _
  $region5: #{lm_head_forward.1} parent=0 // pred_fallthru
    _
  // Predicated region
  $region6: #{lm_head_forward.1} parent=0 // pred_check
    _
  $region7: #{lm_head_forward.1} parent=0 // pred_check_branch
    %10 = sbr.rel (0) target = $region9
  $region8: #{lm_head_forward.1} parent=0 // pred_region
    _
  $region9: #{lm_head_forward.1} parent=0 // pred_fallthru
    _
  %p11 = scmp.eq.s32.totalorder 0, 0
  // Predicated region
  $region10: #{lm_head_forward.1} parent=0 // pred_check
    %p12 = pneg %p11
  $region11: #{lm_head_forward.1} parent=0 // pred_check_branch
    %14 = sbr.rel (%p12) target = $region13
  $region12: #{lm_head_forward.1} parent=0 // pred_region
    %15 = vst [vmem:[#allocation2] sm:$0xff] 0.0
    %16 = vst [vmem:[#allocation2 + $0x8] sm:$0xff] 0.0
  $region13: #{lm_head_forward.1} parent=0 // pred_fallthru
    _
  %v17 = vld [vmem:[%s0] sm:$0xff]
  %v18 = vld [vmem:[%s0 + $0x8] sm:$0xff]
  %v19 = vld [vmem:[%s1] sm:$0xff]
  %v20 = vld [vmem:[%s1 + $0x8] sm:$0xff]
  %v21 = vld [vmem:[%s1 + $0x10] sm:$0xff]
  %v22 = vld [vmem:[%s1 + $0x18] sm:$0xff]
  %v23 = vld [vmem:[%s1 + $0x20] sm:$0xff]
  %v24 = vld [vmem:[%s1 + $0x28] sm:$0xff]
  %v25 = vld [vmem:[%s1 + $0x30] sm:$0xff]
  %v26 = vld [vmem:[%s1 + $0x38] sm:$0xff]
  %v27 = vld [vmem:[%s1 + $0x40] sm:$0xff]
  %v28 = vld [vmem:[%s1 + $0x48] sm:$0xff]
  %v29 = vld [vmem:[%s1 + $0x50] sm:$0xff]
  %v30 = vld [vmem:[%s1 + $0x58] sm:$0xff]
  %v31 = vld [vmem:[%s1 + $0x60] sm:$0xff]
  %v32 = vld [vmem:[%s1 + $0x68] sm:$0xff]
  %v33 = vld [vmem:[%s1 + $0x70] sm:$0xff]
  %v34 = vld [vmem:[%s1 + $0x78] sm:$0xff]
  %v35 = vld [vmem:[#allocation2] sm:$0xff]
  %v36 = vld [vmem:[#allocation2 + $0x8] sm:$0xff]
  %vm37 = vcmask 261120
  %v39 = vsel %vm37, %v17, 0
  %v42 = vsel %vm37, %v18, 0
  %v45 = vsel %vm37, %v19, 0
  %v48 = vsel %vm37, %v20, 0
  %v51 = vsel %vm37, %v21, 0
  %v54 = vsel %vm37, %v22, 0
  %v57 = vsel %vm37, %v23, 0
  %v60 = vsel %vm37, %v24, 0
  %v63 = vsel %vm37, %v25, 0
  %v66 = vsel %vm37, %v26, 0
  %v69 = vsel %vm37, %v27, 0
  %v72 = vsel %vm37, %v28, 0
  %v75 = vsel %vm37, %v29, 0
  %v78 = vsel %vm37, %v30, 0
  %v81 = vsel %vm37, %v31, 0
  %v84 = vsel %vm37, %v32, 0
  %v87 = vsel %vm37, %v33, 0
  %v90 = vsel %vm37, %v34, 0
  %92 = vmatprep.subr.mxu0 0.0
  %93 = vmatpush1.xpose.msra.mxu0 %v45
  %94 = vmatprep.subr.mxu0 0.0
  %95 = vmatpush1.xpose.msra.mxu0 %v48
  %96 = vmatprep.subr.mxu0 0.0
  %97 = vmatpush1.xpose.msra.mxu0 %v51
  %98 = vmatprep.subr.mxu0 0.0
  %99 = vmatpush1.xpose.msra.mxu0 %v54
  %100 = vmatprep.subr.mxu0 0.0
  %101 = vmatpush1.xpose.msra.mxu0 %v57
  %102 = vmatprep.subr.mxu0 0.0
  %103 = vmatpush1.xpose.msra.mxu0 %v60
  %104 = vmatprep.subr.mxu0 0.0
  %105 = vmatpush1.xpose.msra.mxu0 %v63
  %106 = vmatprep.subr.mxu0 0.0
  %107 = vmatpush1.xpose.msra.mxu0 %v66
  %108 = vmatprep.subr.mxu0 0.0
  %109 = vmatpush1.xpose.msra.mxu0 %v69
  %110 = vmatprep.subr.mxu0 0.0
  %111 = vmatpush1.xpose.msra.mxu0 %v72
  %112 = vmatprep.subr.mxu0 0.0
  %113 = vmatpush1.xpose.msra.mxu0 %v75
  %114 = vmatprep.subr.mxu0 0.0
  %115 = vmatpush1.xpose.msra.mxu0 %v78
  %116 = vmatprep.subr.mxu0 0.0
  %117 = vmatpush1.xpose.msra.mxu0 %v81
  %118 = vmatprep.subr.mxu0 0.0
  %119 = vmatpush1.xpose.msra.mxu0 %v84
  %120 = vmatprep.subr.mxu0 0.0
  %121 = vmatpush1.xpose.msra.mxu0 %v87
  %122 = vmatprep.subr.mxu0 0.0
  %123 = vmatpush1.xpose.msra.mxu0 %v90
  %124 = vmatprep.subr.mxu0 0.0
  %125 = vmatpush1.xpose.msra.mxu0 0.0
  %126 = vmatprep.subr.mxu0 0.0
  %127 = vmatpush1.xpose.msra.mxu0 0.0
  %128 = vmatprep.subr.mxu0 0.0
  %129 = vmatpush1.xpose.msra.mxu0 0.0
  %130 = vmatprep.subr.mxu0 0.0
  %131 = vmatpush1.xpose.msra.mxu0 0.0
  %132 = vmatprep.subr.mxu0 0.0
  %133 = vmatpush1.xpose.msra.mxu0 0.0
  %134 = vmatprep.subr.mxu0 0.0
  %135 = vmatpush1.xpose.msra.mxu0 0.0
  %136 = vmatprep.subr.mxu0 0.0
  %137 = vmatpush1.xpose.msra.mxu0 0.0
  %138 = vmatprep.subr.mxu0 0.0
  %139 = vmatpush1.xpose.msra.mxu0 0.0
  %140 = vmatprep.subr.mxu0 0.0
  %141 = vmatpush1.xpose.msra.mxu0 0.0
  %142 = vmatprep.subr.mxu0 0.0
  %143 = vmatpush1.xpose.msra.mxu0 0.0
  %144 = vmatprep.subr.mxu0 0.0
  %145 = vmatpush1.xpose.msra.mxu0 0.0
  %146 = vmatprep.subr.mxu0 0.0
  %147 = vmatpush1.xpose.msra.mxu0 0.0
  %148 = vmatprep.subr.mxu0 0.0
  %149 = vmatpush1.xpose.msra.mxu0 0.0
  %150 = vmatprep.subr.mxu0 0.0
  %151 = vmatpush1.xpose.msra.mxu0 0.0
  %152 = vmatprep.subr.mxu0 0.0
  %153 = vmatpush1.xpose.msra.mxu0 0.0
  %154 = vmatprep.subr.mxu0 0.0
  %155 = vmatpush1.xpose.msra.mxu0 0.0
  %156 = vmatprep.mubr.f32.mxu0 0.0
  %157 = vmatmul.mubr.f32.gmra.mrb[0].mxu0 %v39
  %v158 = vpop.f32.mrb[0].mxu0
  %v159 = vadd.f32 0.0, %v158
  %v160 = vpop.f32.mrb[0].mxu0
  %161 = vmatprep.mubr.f32.mxu0 0.0
  %162 = vmatmul.mubr.f32.gmra.mrb[0].mxu0 %v42
  %v163 = vpop.f32.mrb[0].mxu0
  %v164 = vadd.f32 0.0, %v163
  %v165 = vpop.f32.mrb[0].mxu0
  %166 = vdwg.mxu0
  %v167 = vadd.f32 %v35, %v159
  %v168 = vadd.f32 %v36, %v164
  %169 = vst [vmem:[#allocation2] sm:$0xff] %v167
  %170 = vst [vmem:[#allocation2 + $0x8] sm:$0xff] %v168
  // Predicated region
  $region14: #{lm_head_forward.1} parent=0 // pred_check
    %p171 = pneg %p11
  $region15: #{lm_head_forward.1} parent=0 // pred_check_branch
    %173 = sbr.rel (%p171) target = $region17
  $region16: #{lm_head_forward.1} parent=0 // pred_region
    %v174 = vld [vmem:[#allocation2] sm:$0xff]
    %v175 = vld [vmem:[#allocation2 + $0x8] sm:$0xff]
    %176 = vst [vmem:[%s2] sm:$0xff] %v174
    %177 = vst [vmem:[%s2 + $0x8] sm:$0xff] %v175
  $region17: #{lm_head_forward.1} parent=0 // pred_fallthru
    _
  // Predicated region
  $region18: #{lm_head_forward.1} parent=0 // pred_check
    _
  $region19: #{lm_head_forward.1} parent=0 // pred_check_branch
    %179 = sbr.rel (0) target = $region21
  $region20: #{lm_head_forward.1} parent=0 // pred_region
    _
  $region21: #{lm_head_forward.1} parent=0 // pred_fallthru
    _
  // Predicated region
  $region22: #{lm_head_forward.1} parent=0 // pred_check
    _
  $region23: #{lm_head_forward.1} parent=0 // pred_check_branch
    %181 = sbr.rel (0) target = $region25
  $region24: #{lm_head_forward.1} parent=0 // pred_region
    _
  $region25: #{lm_head_forward.1} parent=0 // pred_fallthru
    _

</llo_original>
